<compile_context>
chip_gen: v7x
topology: tpu7x:2x2x1
jax: 0.10.0
libtpu: 0.0.40
codegen_flags: <defaults>
</compile_context>

<pallas_src>
import jax
import jax.numpy as jnp
from jax.experimental import pallas as pl
from jax.experimental.pallas import tpu as pltpu


# Packed-constant layout: one f32 array of shape [32, _PACK_COLS].
#   cols  0:32, rows 0:16 -> w2^T (16, 32)
#   cols 32:34            -> w1^T (32, 2)
#   col  34               -> b1^T (32, 1)
#   col  35,   rows 0:16  -> b2^T (16, 1)
#   col  36,   rows 0:16  -> w3   (16, 1)
#   col  37,   row  0     -> b3   (1, 1)
_PACK_COLS = 38
_BM_CAP = 32768  # keeps intermediates + double-buffered I/O << 32 MiB scoped VMEM (v7x-safe)


def _mlp_kernel(xt_ref, const_ref, o_ref):
    """Fused Linear(2,32)+ReLU -> Linear(32,16)+ReLU -> Linear(16,1)+Sigmoid."""
    xt = xt_ref[...]                                   # [2, bm]  batch on lanes
    c = const_ref[...]                                 # [32, _PACK_COLS]

    w2t = c[0:16, 0:32]                                # [16, 32]
    w1t = c[:, 32:34]                                  # [32, 2]
    b1t = c[:, 34:35]                                  # [32, 1]
    b2t = c[0:16, 35:36]                               # [16, 1]
    w3 = c[0:16, 36:37]                                # [16, 1]
    b3 = c[0:1, 37:38]                                 # [1, 1]

    # ---- Linear(2, 32) + ReLU: two broadcast multiply-adds on the VPU (no MXU) ----
    h1 = w1t[:, 0:1] * xt[0:1, :] + w1t[:, 1:2] * xt[1:2, :] + b1t   # [32, bm]
    h1 = jnp.maximum(h1, 0.0)

    # ---- Linear(32, 16) + ReLU: the only layer worth the MXU round-trip.
    # The tiny 16x32 weight is the LHS so it can stay MXU-resident while h1 streams.
    # TODO(synk): bundle-dump check that Mosaic keeps w2t as the stationary operand at large bm.
    h2 = jnp.dot(w2t, h1, preferred_element_type=jnp.float32) + b2t  # [16, bm]
    h2 = jnp.maximum(h2, 0.0)

    # ---- Linear(16, 1): weighted sublane reduction (XLU), no MXU ----
    z = jnp.sum(h2 * w3, axis=0, keepdims=True) + b3                 # [1, bm]

    # ---- Sigmoid: exp and the reciprocal run in the (otherwise idle) EUP slot.
    # Exact f32 1/(1+exp(-z)) so the 1e-5 correctness check holds on all chips.
    o_ref[...] = (1.0 / (1.0 + jnp.exp(-z))).astype(o_ref.dtype)


def _pack_constants(params):
    """Collapse all weights/biases into one small constant slab (single BlockSpec)."""
    w1t = params["w1"].T                               # [32, 2]
    b1t = params["b1"].T                               # [32, 1]
    w2t = params["w2"].T                               # [16, 32]
    b2t = params["b2"].T                               # [16, 1]
    w3 = params["w3"]                                  # [16, 1]
    b3 = params["b3"]                                  # [1, 1]
    pack = jnp.zeros((32, _PACK_COLS), jnp.float32)
    pack = pack.at[0:16, 0:32].set(w2t)
    pack = pack.at[:, 32:34].set(w1t)
    pack = pack.at[:, 34:35].set(b1t)
    pack = pack.at[0:16, 35:36].set(b2t)
    pack = pack.at[0:16, 36:37].set(w3)
    pack = pack.at[0:1, 37:38].set(b3)
    return pack


def location_model_forward(x, params, *, bm=16384):
    """x: [B, 2] float32; params dict with w{1,2,3}/b{1,2,3}. Returns [B, 1] float32."""
    B = x.shape[0]

    # Lane-aligned batch tile: multiple of 128, capped for v7x VMEM, and never
    # larger than the 128-padded batch (so small B runs as exactly ONE tile —
    # no forced 2-tile minimum on single-TC v5e/v6e).
    b_pad = 128 * pl.cdiv(B, 128)
    bm = max(128, min((bm // 128) * 128, _BM_CAP, b_pad))
    n_tiles = pl.cdiv(B, bm)
    Bp = n_tiles * bm

    # Present the problem transposed: batch on the lane axis, padded to Bp.
    # NOTE: if the upstream producer can emit x already as a [2, B] slab, feed
    # that directly here (skipping this pad+transpose) — it is the only extra
    # HBM round trip left in the wrapper. The output-side .T below is a free
    # reshape of a [1, B] slab.
    xt = jnp.pad(x, ((0, Bp - B), (0, 0))).T            # [2, Bp]
    consts = _pack_constants(params)                     # [32, _PACK_COLS]

    out_t = pl.pallas_call(
        _mlp_kernel,
        out_shape=jax.ShapeDtypeStruct((1, Bp), jnp.float32),
        grid_spec=pltpu.PrefetchScalarGridSpec(
            num_scalar_prefetch=0,
            grid=(n_tiles,),
            in_specs=[
                pl.BlockSpec((2, bm), lambda i: (0, i)),              # x^T tile (lane-dense)
                pl.BlockSpec((32, _PACK_COLS), lambda i: (0, 0)),     # packed constants (not re-DMA'd)
            ],
            out_specs=pl.BlockSpec((1, bm), lambda i: (0, i)),        # lane-dense output
        ),
        compiler_params=pltpu.CompilerParams(
            dimension_semantics=("parallel",),   # shards real tiles across v7x's 2 TCs
        ),
    )(xt, consts)

    return out_t[:, :B].T                                 # [B, 1]


def init_params(key):
    """Deterministic init mimicking nn.Linear's uniform(-1/sqrt(fan_in), +1/sqrt(fan_in)).
    Weights stored as [in_features, out_features]; biases as [1, out_features]."""
    dims = [(2, 32), (32, 16), (16, 1)]
    params = {}
    for idx, (fan_in, fan_out) in enumerate(dims, start=1):
        key, kw, kb = jax.random.split(key, 3)
        bound = 1.0 / jnp.sqrt(fan_in)
        params[f"w{idx}"] = jax.random.uniform(
            kw, (fan_in, fan_out), jnp.float32, -bound, bound
        )
        params[f"b{idx}"] = jax.random.uniform(
            kb, (1, fan_out), jnp.float32, -bound, bound
        )
    return params


def reference_forward(x, params):
    h = jnp.maximum(x @ params["w1"] + params["b1"], 0.0)
    h = jnp.maximum(h @ params["w2"] + params["b2"], 0.0)
    return jax.nn.sigmoid(h @ params["w3"] + params["b3"])


if __name__ == "__main__":
    key = jax.random.PRNGKey(0)
    key, kx = jax.random.split(key)
    B = 8  # small batch of (x, y) location pairs
    x = jax.random.normal(kx, (B, 2), jnp.float32)

    params = init_params(jax.random.PRNGKey(0))

    out = location_model_forward(x, params)
    out = jax.block_until_ready(out)

    ref = reference_forward(x, params)
    assert out.shape == (B, 1)
    assert jnp.allclose(out, ref, atol=1e-5, rtol=1e-5), "mismatch vs pure-JAX reference"

    print("KERNEL_OK")
</pallas_src>

<mosaic_0001>
module attributes {stable_mosaic.version = 11 : i64} {
  func.func @_mlp_kernel(%arg0: i32, %arg1: memref<2x128xf32, #tpu.memory_space<vmem>>, %arg2: memref<32x38xf32, #tpu.memory_space<vmem>>, %arg3: memref<1x128xf32, #tpu.memory_space<vmem>>) attributes {dimension_semantics = [#tpu.dimension_semantics<parallel>], iteration_bounds = array<i64: 1>, scalar_prefetch = 0 : i64, scratch_operands = 0 : i64, tpu.core_type = #tpu.core_type<tc>, window_params = [{transform_indices = @transform_0, window_bounds = array<i64: 2, 128>}, {pipeline_mode = #tpu.pipeline_mode<synchronous>, transform_indices = @transform_1, window_bounds = array<i64: 32, 38>}, {transform_indices = @transform_2, window_bounds = array<i64: 1, 128>}]} {
    %c0 = arith.constant 0 : index
    %c0_0 = arith.constant 0 : index
    %0 = vector.load %arg1[%c0, %c0_0] : memref<2x128xf32, #tpu.memory_space<vmem>>, vector<2x128xf32>
    %c0_1 = arith.constant 0 : index
    %c0_2 = arith.constant 0 : index
    %1 = vector.load %arg2[%c0_1, %c0_2] : memref<32x38xf32, #tpu.memory_space<vmem>>, vector<32x38xf32>
    %2 = vector.extract_strided_slice %1 {offsets = [0, 0], sizes = [16, 32], strides = [1, 1]} : vector<32x38xf32> to vector<16x32xf32>
    %3 = vector.extract_strided_slice %1 {offsets = [0, 32], sizes = [32, 2], strides = [1, 1]} : vector<32x38xf32> to vector<32x2xf32>
    %4 = vector.extract_strided_slice %1 {offsets = [0, 34], sizes = [32, 1], strides = [1, 1]} : vector<32x38xf32> to vector<32x1xf32>
    %5 = vector.extract_strided_slice %1 {offsets = [0, 35], sizes = [16, 1], strides = [1, 1]} : vector<32x38xf32> to vector<16x1xf32>
    %6 = vector.extract_strided_slice %1 {offsets = [0, 36], sizes = [16, 1], strides = [1, 1]} : vector<32x38xf32> to vector<16x1xf32>
    %7 = vector.extract_strided_slice %1 {offsets = [0, 37], sizes = [1, 1], strides = [1, 1]} : vector<32x38xf32> to vector<1x1xf32>
    %8 = vector.extract_strided_slice %3 {offsets = [0, 0], sizes = [32, 1], strides = [1, 1]} : vector<32x2xf32> to vector<32x1xf32>
    %9 = vector.extract_strided_slice %0 {offsets = [0, 0], sizes = [1, 128], strides = [1, 1]} : vector<2x128xf32> to vector<1x128xf32>
    %10 = vector.broadcast %8 : vector<32x1xf32> to vector<32x128xf32>
    %11 = vector.broadcast %9 : vector<1x128xf32> to vector<32x128xf32>
    %12 = arith.mulf %10, %11 : vector<32x128xf32>
    %13 = vector.extract_strided_slice %3 {offsets = [0, 1], sizes = [32, 1], strides = [1, 1]} : vector<32x2xf32> to vector<32x1xf32>
    %14 = vector.extract_strided_slice %0 {offsets = [1, 0], sizes = [1, 128], strides = [1, 1]} : vector<2x128xf32> to vector<1x128xf32>
    %15 = vector.broadcast %13 : vector<32x1xf32> to vector<32x128xf32>
    %16 = vector.broadcast %14 : vector<1x128xf32> to vector<32x128xf32>
    %17 = arith.mulf %15, %16 : vector<32x128xf32>
    %18 = arith.addf %12, %17 : vector<32x128xf32>
    %19 = vector.broadcast %4 : vector<32x1xf32> to vector<32x128xf32>
    %20 = arith.addf %18, %19 : vector<32x128xf32>
    %cst = arith.constant 0.000000e+00 : f32
    %21 = vector.broadcast %cst : f32 to vector<32x128xf32>
    %22 = arith.maximumf %20, %21 : vector<32x128xf32>
    %cst_3 = arith.constant dense<0.000000e+00> : vector<16x128xf32>
    %23 = tpu.matmul %2, %22, %cst_3 {dimension_numbers = #tpu.dot_dimension_numbers<[1], [0], [0], [1], [0, 0, 1, 1], [], []>} : vector<16x32xf32>, vector<32x128xf32>, vector<16x128xf32> -> vector<16x128xf32>
    %24 = vector.broadcast %5 : vector<16x1xf32> to vector<16x128xf32>
    %25 = arith.addf %23, %24 : vector<16x128xf32>
    %cst_4 = arith.constant 0.000000e+00 : f32
    %26 = vector.broadcast %cst_4 : f32 to vector<16x128xf32>
    %27 = arith.maximumf %25, %26 : vector<16x128xf32>
    %28 = vector.broadcast %6 : vector<16x1xf32> to vector<16x128xf32>
    %29 = arith.mulf %27, %28 : vector<16x128xf32>
    %cst_5 = arith.constant dense<0.000000e+00> : vector<128xf32>
    %30 = vector.multi_reduction <add>, %29, %cst_5 [0] : vector<16x128xf32> to vector<128xf32>
    %31 = vector.shape_cast %30 : vector<128xf32> to vector<1x128xf32>
    %32 = vector.broadcast %7 : vector<1x1xf32> to vector<1x128xf32>
    %33 = arith.addf %31, %32 : vector<1x128xf32>
    %cst_6 = arith.constant 0.000000e+00 : f32
    %34 = vector.broadcast %cst_6 : f32 to vector<1x128xf32>
    %35 = arith.subf %34, %33 : vector<1x128xf32>
    %36 = math.exp %35 : vector<1x128xf32>
    %cst_7 = arith.constant 1.000000e+00 : f32
    %37 = vector.broadcast %cst_7 : f32 to vector<1x128xf32>
    %38 = arith.addf %37, %36 : vector<1x128xf32>
    %cst_8 = arith.constant 1.000000e+00 : f32
    %39 = vector.broadcast %cst_8 : f32 to vector<1x128xf32>
    %40 = arith.divf %39, %38 : vector<1x128xf32>
    %c0_9 = arith.constant 0 : index
    %c0_10 = arith.constant 0 : index
    %41 = vector.load %arg3[%c0_9, %c0_10] : memref<1x128xf32, #tpu.memory_space<vmem>>, vector<1x128xf32>
    tpu.vector_store %arg3[%c0_9, %c0_10], %40 {strides = array<i32>} : memref<1x128xf32, #tpu.memory_space<vmem>>, vector<1x128xf32>,
    return
  }
  func.func @transform_0(%arg0: i32) -> (i32, i32) {
    %c0_i32 = arith.constant 0 : i32
    %c0_i32_0 = arith.constant 0 : i32
    return %c0_i32, %arg0 : i32, i32
  }
  func.func @transform_1(%arg0: i32) -> (i32, i32) {
    %c0_i32 = arith.constant 0 : i32
    %c0_i32_0 = arith.constant 0 : i32
    %c0_i32_1 = arith.constant 0 : i32
    return %c0_i32, %c0_i32_0 : i32, i32
  }
  func.func @transform_2(%arg0: i32) -> (i32, i32) {
    %c0_i32 = arith.constant 0 : i32
    %c0_i32_0 = arith.constant 0 : i32
    return %c0_i32, %arg0 : i32, i32
  }
}

</mosaic_0001>

<llo_original>
// kernel: tpu_custom_call.1
$region0: #{tpu_custom_call.1}
  #allocation0 [shape = 'u32[]', space=smem, size = 0x4, offset = 0x4, fixed_abs, tag = 'smem constant byte address 0x4 - core index']
  #allocation1 [shape = 'u32[144,128]{1,0:T(1,128)}', space=vmem, size = 0x12000, scoped, tag = 'internal scratch']
  %s0 = inlined_call_operand.hbm [shape: f32[2,128], index: 0, kind: input, shape index: {}]
  %s1 = inlined_call_operand.hbm [shape: f32[32,38], index: 1, kind: input, shape index: {}]
  %s2 = inlined_call_operand.hbm [shape: f32[1,128], index: 2, kind: output, shape index: {}]
  %s3 = sld [smem:[#allocation0]]
  $region26: #{tpu_custom_call.1} parent=0
    _
  %s5 = ssub.s32 1, %s3
  %s6 = scalar_select 0, %s5, %s3
  $region1: #{tpu_custom_call.1} parent=0
    #allocation2 [shape = 'u8[1024]{0}', space=vmem, size = 0x400, scoped, tag = 'input window, operand 0, single buffered']
    #allocation3 [shape = 's32[1]{0}', space=sflag, size = 0x4, scoped, tag = 'scoped memory for tpu_custom_call.1']
    #allocation4 [shape = 's32[1]{0}', space=sflag, size = 0x4, scoped, tag = 'scoped memory for tpu_custom_call.1']
    #allocation5 [shape = 'u8[16384]{0}', space=vmem, size = 0x4000, scoped, tag = 'input window, operand 1, single buffered']
    #allocation6 [shape = 's32[1]{0}', space=sflag, size = 0x4, scoped, tag = 'scoped memory for tpu_custom_call.1']
    #allocation7 [shape = 'u8[512]{0}', space=vmem, size = 0x400, scoped, tag = 'output window, operand 0, single buffered']
    %7 = vsyncpa [#allocation3], 0
    %8 = vsyncpa [#allocation6], 0
    %9 = vsyncpa [#allocation4], 0
    // Predicated region
    $region2: #{tpu_custom_call.1} parent=1 // pred_check
      _
    $region3: #{tpu_custom_call.1} parent=1 // pred_check_branch
      %11 = sbr.rel (0) target = $region5
    $region4: #{tpu_custom_call.1} parent=1 // pred_region
      %s13 = ssub.s32 32, 32
      %14 = vsyncadd [#allocation3], %s13
      %s16 = sshll.u32 [#allocation2], 4
      %s17 = int_to_ptr.vmem [resolvable:$true] %s16
      %19 = dma.hbm_to_vmem [thread:$0]  %s0, 32, %s17, [#allocation3]
    $region5: #{tpu_custom_call.1} parent=1 // pred_fallthru
      _
    // Predicated region
    $region6: #{tpu_custom_call.1} parent=1 // pred_check
      _
    $region7: #{tpu_custom_call.1} parent=1 // pred_check_branch
      %21 = sbr.rel (0) target = $region9
    $region8: #{tpu_custom_call.1} parent=1 // pred_region
      %s23 = ssub.s32 512, 512
      %24 = vsyncadd [#allocation6], %s23
      %s25 = sshll.u32 [#allocation5], 4
      %s26 = int_to_ptr.vmem [resolvable:$true] %s25
      %31 = dma.hbm_to_vmem [thread:$0]  %s1, 512, %s26, [#allocation6], 128, 128, 8
    $region9: #{tpu_custom_call.1} parent=1 // pred_fallthru
      _
    // Predicated region
    $region10: #{tpu_custom_call.1} parent=1 // pred_check
      _
    $region11: #{tpu_custom_call.1} parent=1 // pred_check_branch
      %33 = sbr.rel (0) target = $region13
    $region12: #{tpu_custom_call.1} parent=1 // pred_region
      %34 = dma.done [#allocation3], 32
    $region13: #{tpu_custom_call.1} parent=1 // pred_fallthru
      _
    // Predicated region
    $region14: #{tpu_custom_call.1} parent=1 // pred_check
      _
    $region15: #{tpu_custom_call.1} parent=1 // pred_check_branch
      %36 = sbr.rel (0) target = $region17
    $region16: #{tpu_custom_call.1} parent=1 // pred_region
      %37 = dma.done [#allocation6], 512
    $region17: #{tpu_custom_call.1} parent=1 // pred_fallthru
      _
    %v38 = vld [vmem:[#allocation2] sm:$0x3]
    %v39 = vld [vmem:[#allocation5] sm:$0xff]
    %v40 = vld [vmem:[#allocation5 + $0x8] sm:$0xff]
    %v41 = vld [vmem:[#allocation5 + $0x10] sm:$0xff]
    %v42 = vld [vmem:[#allocation5 + $0x18] sm:$0xff]
    %44 = vset.pattern.permute.xlu0 32
    %45 = vperm.xlu0 %44, %v39
    %v46 = vpop.permute.xlu0 %45
    %49 = vset.pattern.permute.xlu0 32
    %50 = vperm.xlu0 %49, %v40
    %v51 = vpop.permute.xlu0 %50
    %54 = vset.pattern.permute.xlu0 32
    %55 = vperm.xlu0 %54, %v41
    %v56 = vpop.permute.xlu0 %55
    %59 = vset.pattern.permute.xlu0 32
    %60 = vperm.xlu0 %59, %v42
    %v61 = vpop.permute.xlu0 %60
    %v63 = vlaneseq
    %v64 = vshrl.u32 %v63, 7
    %v65 = vsub.s32 0, %v64
    %v66 = vrot.slane %v38, %v65
    %v67 = vmul.f32 %v46, %v66
    %v68 = vmul.f32 %v51, %v66
    %v69 = vmul.f32 %v56, %v66
    %v70 = vmul.f32 %v61, %v66
    %71 = vset.pattern.permute.xlu0 33
    %72 = vperm.xlu0 %71, %v39
    %v73 = vpop.permute.xlu0 %72
    %75 = vset.pattern.permute.xlu0 33
    %76 = vperm.xlu0 %75, %v40
    %v77 = vpop.permute.xlu0 %76
    %79 = vset.pattern.permute.xlu0 33
    %80 = vperm.xlu0 %79, %v41
    %v81 = vpop.permute.xlu0 %80
    %83 = vset.pattern.permute.xlu0 33
    %84 = vperm.xlu0 %83, %v42
    %v85 = vpop.permute.xlu0 %84
    %v87 = vlaneseq
    %v88 = vshrl.u32 %v87, 7
    %v89 = vsub.s32 1, %v88
    %v90 = vrot.slane %v38, %v89
    %v91 = vmul.f32 %v73, %v90
    %v92 = vmul.f32 %v77, %v90
    %v93 = vmul.f32 %v81, %v90
    %v94 = vmul.f32 %v85, %v90
    %v95 = vadd.f32 %v67, %v91
    %v96 = vadd.f32 %v68, %v92
    %v97 = vadd.f32 %v69, %v93
    %v98 = vadd.f32 %v70, %v94
    %99 = vset.pattern.permute.xlu0 34
    %100 = vperm.xlu0 %99, %v39
    %v101 = vpop.permute.xlu0 %100
    %103 = vset.pattern.permute.xlu0 34
    %104 = vperm.xlu0 %103, %v40
    %v105 = vpop.permute.xlu0 %104
    %107 = vset.pattern.permute.xlu0 34
    %108 = vperm.xlu0 %107, %v41
    %v109 = vpop.permute.xlu0 %108
    %111 = vset.pattern.permute.xlu0 34
    %112 = vperm.xlu0 %111, %v42
    %v113 = vpop.permute.xlu0 %112
    %v115 = vadd.f32 %v95, %v101
    %v116 = vadd.f32 %v96, %v105
    %v117 = vadd.f32 %v97, %v109
    %v118 = vadd.f32 %v98, %v113
    %v119 = vmax.f32 %v115, 0.0
    %v120 = vmax.f32 %v116, 0.0
    %v121 = vmax.f32 %v117, 0.0
    %v122 = vmax.f32 %v118, 0.0
    %123 = vset.pattern.permute.xlu0 35
    %124 = vperm.xlu0 %123, %v39
    %v125 = vpop.permute.xlu0 %124
    %127 = vset.pattern.permute.xlu0 35
    %128 = vperm.xlu0 %127, %v40
    %v129 = vpop.permute.xlu0 %128
    %vm131 = vcmask 261120
    %v132 = vsel %vm131, %v39, 0
    %v134 = vsel %vm131, %v40, 0
    %136 = vmatprep.subr.mxu0 0.0
    %137 = vmatpush1.msra.mxu0 %v119
    %138 = vmatprep.subr.mxu0 0.0
    %139 = vmatpush1.msra.mxu0 %v120
    %140 = vmatprep.subr.mxu0 0.0
    %141 = vmatpush1.msra.mxu0 %v121
    %142 = vmatprep.subr.mxu0 0.0
    %143 = vmatpush1.msra.mxu0 %v122
    %144 = vmatprep.subr.mxu0 0.0
    %145 = vmatpush1.msra.mxu0 0.0
    %146 = vmatprep.subr.mxu0 0.0
    %147 = vmatpush1.msra.mxu0 0.0
    %148 = vmatprep.subr.mxu0 0.0
    %149 = vmatpush1.msra.mxu0 0.0
    %150 = vmatprep.subr.mxu0 0.0
    %151 = vmatpush1.msra.mxu0 0.0
    %152 = vmatprep.subr.mxu0 0.0
    %153 = vmatpush1.msra.mxu0 0.0
    %154 = vmatprep.subr.mxu0 0.0
    %155 = vmatpush1.msra.mxu0 0.0
    %156 = vmatprep.subr.mxu0 0.0
    %157 = vmatpush1.msra.mxu0 0.0
    %158 = vmatprep.subr.mxu0 0.0
    %159 = vmatpush1.msra.mxu0 0.0
    %160 = vmatprep.subr.mxu0 0.0
    %161 = vmatpush1.msra.mxu0 0.0
    %162 = vmatprep.subr.mxu0 0.0
    %163 = vmatpush1.msra.mxu0 0.0
    %164 = vmatprep.subr.mxu0 0.0
    %165 = vmatpush1.msra.mxu0 0.0
    %166 = vmatprep.subr.mxu0 0.0
    %167 = vmatpush1.msra.mxu0 0.0
    %168 = vmatprep.subr.mxu0 0.0
    %169 = vmatpush1.msra.mxu0 0.0
    %170 = vmatprep.subr.mxu0 0.0
    %171 = vmatpush1.msra.mxu0 0.0
    %172 = vmatprep.subr.mxu0 0.0
    %173 = vmatpush1.msra.mxu0 0.0
    %174 = vmatprep.subr.mxu0 0.0
    %175 = vmatpush1.msra.mxu0 0.0
    %176 = vmatprep.subr.mxu0 0.0
    %177 = vmatpush1.msra.mxu0 0.0
    %178 = vmatprep.subr.mxu0 0.0
    %179 = vmatpush1.msra.mxu0 0.0
    %180 = vmatprep.subr.mxu0 0.0
    %181 = vmatpush1.msra.mxu0 0.0
    %182 = vmatprep.subr.mxu0 0.0
    %183 = vmatpush1.msra.mxu0 0.0
    %184 = vmatprep.subr.mxu0 0.0
    %185 = vmatpush1.msra.mxu0 0.0
    %186 = vmatprep.subr.mxu0 0.0
    %187 = vmatpush1.msra.mxu0 0.0
    %188 = vmatprep.subr.mxu0 0.0
    %189 = vmatpush1.msra.mxu0 0.0
    %190 = vmatprep.subr.mxu0 0.0
    %191 = vmatpush1.msra.mxu0 0.0
    %192 = vmatprep.subr.mxu0 0.0
    %193 = vmatpush1.msra.mxu0 0.0
    %194 = vmatprep.subr.mxu0 0.0
    %195 = vmatpush1.msra.mxu0 0.0
    %196 = vmatprep.subr.mxu0 0.0
    %197 = vmatpush1.msra.mxu0 0.0
    %198 = vmatprep.subr.mxu0 0.0
    %199 = vmatpush1.msra.mxu0 0.0
    %200 = vmatprep.mubr.f32.mxu0 0.0
    %201 = vmatmul.mubr.f32.gmra.mrb[0].mxu0 %v132
    %v202 = vpop.f32.mrb[0].mxu0
    %v203 = vadd.f32 %v125, %v202
    %v204 = vpop.f32.mrb[0].mxu0
    %205 = vmatprep.mubr.f32.mxu0 0.0
    %206 = vmatmul.mubr.f32.gmra.mrb[0].mxu0 %v134
    %v207 = vpop.f32.mrb[0].mxu0
    %v208 = vadd.f32 %v129, %v207
    %v209 = vpop.f32.mrb[0].mxu0
    %210 = vdwg.mxu0
    %v211 = vmax.f32 %v203, 0.0
    %v212 = vmax.f32 %v208, 0.0
    %213 = vset.pattern.permute.xlu0 36
    %214 = vperm.xlu0 %213, %v39
    %v215 = vpop.permute.xlu0 %214
    %217 = vset.pattern.permute.xlu0 36
    %218 = vperm.xlu0 %217, %v40
    %v219 = vpop.permute.xlu0 %218
    %v221 = vmul.f32 %v211, %v215
    %v222 = vmul.f32 %v212, %v219
    %v223 = vadd.f32 %v221, %v222
    %v224 = vrot.slane %v223, 4
    %v225 = vadd.f32 %v223, %v224
    %v226 = vrot.slane %v225, 2
    %v227 = vadd.f32 %v225, %v226
    %v228 = vrot.slane %v227, 1
    %v229 = vadd.f32 %v227, %v228
    %230 = vset.pattern.permute.xlu0 37
    %231 = vperm.xlu0 %230, %v39
    %v232 = vpop.permute.xlu0 %231
    %v234 = vadd.f32 %v229, %v232
    %v235 = vsub.f32 0.0, %v234
    %v236 = vmul.f32 %v235, 1.442695
    %v237 = vpow.pop %v236
    %v238 = vadd.f32 %v237, 1.0
    %v239 = vrcp.pop %v238
    %v240 = vmul.f32 1.0, %v239
    %241 = vst [vmem:[#allocation7] sm:$0x1] %v240
    // Predicated region
    $region18: #{tpu_custom_call.1} parent=1 // pred_check
      _
    $region19: #{tpu_custom_call.1} parent=1 // pred_check_branch
      %243 = sbr.rel (0) target = $region21
    $region20: #{tpu_custom_call.1} parent=1 // pred_region
      %s245 = ssub.s32 16, 16
      %246 = vsyncadd [#allocation4], %s245
      %s248 = sshll.u32 [#allocation7], 4
      %s249 = int_to_ptr.vmem [resolvable:$true] %s248
      %251 = dma.vmem_to_hbm [thread:$0]  %s249, 16, %s2, [#allocation4]
    $region21: #{tpu_custom_call.1} parent=1 // pred_fallthru
      _
    // Predicated region
    $region22: #{tpu_custom_call.1} parent=1 // pred_check
      _
    $region23: #{tpu_custom_call.1} parent=1 // pred_check_branch
      %253 = sbr.rel (0) target = $region25
    $region24: #{tpu_custom_call.1} parent=1 // pred_region
      %254 = dma.done [#allocation4], 16
    $region25: #{tpu_custom_call.1} parent=1 // pred_fallthru
      _
    %255 = vsyncpa [#allocation3], 1
    %256 = vsyncpa [#allocation6], 1
    %257 = vsyncpa [#allocation4], 1

</llo_original>
